<compile_context>
chip_gen: v5e
topology: v5e:2x2
jax: 0.10.0
libtpu: 0.0.40
codegen_flags: <defaults>
</compile_context>

<pallas_src>
import jax
import jax.numpy as jnp
from jax import lax
from jax.experimental import pallas as pl
from jax.experimental.pallas import tpu as pltpu

C_IN, C_OUT, KH, KW = 6, 16, 5, 5


def _round_up(x, m):
    return (x + m - 1) // m * m


def _c2_fused_kernel(p_ref, w_ref, b_ref, o_ref):
    # p_ref: (4, K_PAD, TN) bf16 -- 4 pool-tap parity classes, positions lane-dense
    # w_ref: (C_OUT, K_PAD) bf16
    # b_ref: (C_OUT, 1) f32
    # o_ref: (C_OUT, TN) f32
    w = w_ref[...]
    y0 = jnp.dot(w, p_ref[0], preferred_element_type=jnp.float32)
    y1 = jnp.dot(w, p_ref[1], preferred_element_type=jnp.float32)
    y2 = jnp.dot(w, p_ref[2], preferred_element_type=jnp.float32)
    y3 = jnp.dot(w, p_ref[3], preferred_element_type=jnp.float32)
    # fused 2x2 / stride-2 max pool: elementwise max of the 4 aligned tap groups
    pooled = jnp.maximum(jnp.maximum(y0, y1), jnp.maximum(y2, y3))
    # bias + ReLU (commute with the max: per-channel constant bias, monotone max)
    o_ref[...] = jnp.maximum(pooled + b_ref[...], 0.0).astype(o_ref.dtype)


def c2_forward(img, weight, bias):
    """img: (N, 6, H, W) f32, weight: (16, 6, 5, 5) f32, bias: (16,) f32
       -> (N, 16, (H-4)//2, (W-4)//2) f32 (NCHW), matching the PyTorch C2 module."""
    N, C, H, W = img.shape
    assert C == C_IN
    Ho, Wo = H - KH + 1, W - KW + 1
    PH, PW = Ho // 2, Wo // 2              # MaxPool2d floors odd conv outputs
    K = C_IN * KH * KW                     # 150
    K_PAD = _round_up(K, 16)               # 160: bf16 sublane packing
    NPP = N * PH * PW                      # pooled positions, whole batch
    TN = min(1024, _round_up(max(NPP, 128), 128))   # lane tile, v7x-VMEM safe
    NPP_PAD = _round_up(max(NPP, TN), TN)

    # ---- patch extraction: one fused XLA gather (single conv op). Output feature
    # index k = c*25 + kh*5 + kw matches weight.reshape(C_OUT, K) directly.
    # TODO(synk): build the patch matrix fully in-kernel from a VMEM-resident
    # image; the (oh, ow)->lane flatten does not lower cleanly in Mosaic yet.
    patches = lax.conv_general_dilated_patches(
        img, filter_shape=(KH, KW), window_strides=(1, 1), padding="VALID",
        dimension_numbers=("NCHW", "OIHW", "NCHW"))            # (N, K, Ho, Wo)
    arr = patches[:, :, :2 * PH, :2 * PW].reshape(N, K, PH, 2, PW, 2)
    arr = arr.transpose(3, 5, 1, 0, 2, 4)                      # (dh, dw, k, n, ph, pw)
    arr = arr.reshape(4, K, NPP)
    arr = jnp.pad(arr, ((0, 0), (0, K_PAD - K), (0, NPP_PAD - NPP)))
    patches_b = arr.astype(jnp.bfloat16)                       # (4, K_PAD, NPP_PAD)

    w_mat = weight.reshape(C_OUT, K)
    w_mat = jnp.pad(w_mat, ((0, 0), (0, K_PAD - K))).astype(jnp.bfloat16)
    b_col = bias.reshape(C_OUT, 1).astype(jnp.float32)

    grid = (NPP_PAD // TN,)
    out = pl.pallas_call(
        _c2_fused_kernel,
        out_shape=jax.ShapeDtypeStruct((C_OUT, NPP_PAD), jnp.float32),
        grid=grid,
        in_specs=[
            pl.BlockSpec((4, K_PAD, TN), lambda j: (0, 0, j)),   # positions tiled
            pl.BlockSpec((C_OUT, K_PAD), lambda j: (0, 0)),      # weights resident
            pl.BlockSpec((C_OUT, 1), lambda j: (0, 0)),          # bias resident
        ],
        out_specs=pl.BlockSpec((C_OUT, TN), lambda j: (0, j)),   # lane-dense store
        compiler_params=pltpu.CompilerParams(
            dimension_semantics=("parallel",)),                  # megacore on v7x
    )(patches_b, w_mat, b_col)

    # back to NCHW: valid columns are ordered (n, ph, pw)
    out = out[:, :NPP].reshape(C_OUT, N, PH, PW).transpose(1, 0, 2, 3)
    return out


if __name__ == "__main__":
    key = jax.random.PRNGKey(0)
    k_x, k_w, k_b = jax.random.split(key, 3)

    # LeNet C2 stage input: (N, 6, 14, 14) -> output (N, 16, 5, 5)
    img = jax.random.normal(k_x, (2, 6, 14, 14), dtype=jnp.float32)

    fan_in = C_IN * KH * KW
    bound = 1.0 / (fan_in ** 0.5)
    weight = jax.random.uniform(k_w, (C_OUT, C_IN, KH, KW), jnp.float32, -bound, bound)
    bias = jax.random.uniform(k_b, (C_OUT,), jnp.float32, -bound, bound)

    out = jax.jit(c2_forward)(img, weight, bias)
    out = jax.block_until_ready(out)

    # pure-XLA f32 reference for a sanity check (kernel uses bf16 MXU inputs)
    ref = lax.conv_general_dilated(img, weight, (1, 1), "VALID",
                                   dimension_numbers=("NCHW", "OIHW", "NCHW"))
    ref = jnp.maximum(ref + bias.reshape(1, C_OUT, 1, 1), 0.0)
    ref = lax.reduce_window(ref, -jnp.inf, lax.max, (1, 1, 2, 2), (1, 1, 2, 2), "VALID")

    assert out.shape == (2, C_OUT, 5, 5), out.shape
    err = float(jnp.max(jnp.abs(out - ref)))
    assert err < 3e-2, err   # bf16 matmul inputs -> looser than the old 1e-4
    print("KERNEL_OK")
</pallas_src>

<mosaic_0001>
module attributes {stable_mosaic.version = 11 : i64} {
  func.func @_c2_fused_kernel(%arg0: i32, %arg1: memref<4x160x128xbf16, #tpu.memory_space<vmem>>, %arg2: memref<16x160xbf16, #tpu.memory_space<vmem>>, %arg3: memref<16x1xf32, #tpu.memory_space<vmem>>, %arg4: memref<16x128xf32, #tpu.memory_space<vmem>>) attributes {dimension_semantics = [#tpu.dimension_semantics<parallel>], iteration_bounds = array<i64: 1>, scalar_prefetch = 0 : i64, scratch_operands = 0 : i64, tpu.core_type = #tpu.core_type<tc>, window_params = [{transform_indices = @transform_0, window_bounds = array<i64: 4, 160, 128>}, {pipeline_mode = #tpu.pipeline_mode<synchronous>, transform_indices = @transform_1, window_bounds = array<i64: 16, 160>}, {pipeline_mode = #tpu.pipeline_mode<synchronous>, transform_indices = @transform_2, window_bounds = array<i64: 16, 1>}, {transform_indices = @transform_3, window_bounds = array<i64: 16, 128>}]} {
    %c0 = arith.constant 0 : index
    %c0_0 = arith.constant 0 : index
    %0 = vector.load %arg2[%c0, %c0_0] : memref<16x160xbf16, #tpu.memory_space<vmem>>, vector<16x160xbf16>
    %c0_1 = arith.constant 0 : index
    %c0_2 = arith.constant 0 : index
    %c0_3 = arith.constant 0 : index
    %1 = vector.load %arg1[%c0_1, %c0_2, %c0_3] : memref<4x160x128xbf16, #tpu.memory_space<vmem>>, vector<1x160x128xbf16>
    %2 = vector.shape_cast %1 : vector<1x160x128xbf16> to vector<160x128xbf16>
    %cst = arith.constant dense<0.000000e+00> : vector<16x128xf32>
    %3 = tpu.matmul %0, %2, %cst {dimension_numbers = #tpu.dot_dimension_numbers<[1], [0], [0], [1], [0, 0, 1, 1], [], []>} : vector<16x160xbf16>, vector<160x128xbf16>, vector<16x128xf32> -> vector<16x128xf32>
    %c1 = arith.constant 1 : index
    %c0_4 = arith.constant 0 : index
    %c0_5 = arith.constant 0 : index
    %4 = vector.load %arg1[%c1, %c0_4, %c0_5] : memref<4x160x128xbf16, #tpu.memory_space<vmem>>, vector<1x160x128xbf16>
    %5 = vector.shape_cast %4 : vector<1x160x128xbf16> to vector<160x128xbf16>
    %cst_6 = arith.constant dense<0.000000e+00> : vector<16x128xf32>
    %6 = tpu.matmul %0, %5, %cst_6 {dimension_numbers = #tpu.dot_dimension_numbers<[1], [0], [0], [1], [0, 0, 1, 1], [], []>} : vector<16x160xbf16>, vector<160x128xbf16>, vector<16x128xf32> -> vector<16x128xf32>
    %c2 = arith.constant 2 : index
    %c0_7 = arith.constant 0 : index
    %c0_8 = arith.constant 0 : index
    %7 = vector.load %arg1[%c2, %c0_7, %c0_8] : memref<4x160x128xbf16, #tpu.memory_space<vmem>>, vector<1x160x128xbf16>
    %8 = vector.shape_cast %7 : vector<1x160x128xbf16> to vector<160x128xbf16>
    %cst_9 = arith.constant dense<0.000000e+00> : vector<16x128xf32>
    %9 = tpu.matmul %0, %8, %cst_9 {dimension_numbers = #tpu.dot_dimension_numbers<[1], [0], [0], [1], [0, 0, 1, 1], [], []>} : vector<16x160xbf16>, vector<160x128xbf16>, vector<16x128xf32> -> vector<16x128xf32>
    %c3 = arith.constant 3 : index
    %c0_10 = arith.constant 0 : index
    %c0_11 = arith.constant 0 : index
    %10 = vector.load %arg1[%c3, %c0_10, %c0_11] : memref<4x160x128xbf16, #tpu.memory_space<vmem>>, vector<1x160x128xbf16>
    %11 = vector.shape_cast %10 : vector<1x160x128xbf16> to vector<160x128xbf16>
    %cst_12 = arith.constant dense<0.000000e+00> : vector<16x128xf32>
    %12 = tpu.matmul %0, %11, %cst_12 {dimension_numbers = #tpu.dot_dimension_numbers<[1], [0], [0], [1], [0, 0, 1, 1], [], []>} : vector<16x160xbf16>, vector<160x128xbf16>, vector<16x128xf32> -> vector<16x128xf32>
    %13 = arith.maximumf %3, %6 : vector<16x128xf32>
    %14 = arith.maximumf %9, %12 : vector<16x128xf32>
    %15 = arith.maximumf %13, %14 : vector<16x128xf32>
    %c0_13 = arith.constant 0 : index
    %c0_14 = arith.constant 0 : index
    %16 = vector.load %arg3[%c0_13, %c0_14] : memref<16x1xf32, #tpu.memory_space<vmem>>, vector<16x1xf32>
    %17 = vector.broadcast %16 : vector<16x1xf32> to vector<16x128xf32>
    %18 = arith.addf %15, %17 : vector<16x128xf32>
    %cst_15 = arith.constant 0.000000e+00 : f32
    %19 = vector.broadcast %cst_15 : f32 to vector<16x128xf32>
    %20 = arith.maximumf %18, %19 : vector<16x128xf32>
    %c0_16 = arith.constant 0 : index
    %c0_17 = arith.constant 0 : index
    %21 = vector.load %arg4[%c0_16, %c0_17] : memref<16x128xf32, #tpu.memory_space<vmem>>, vector<16x128xf32>
    tpu.vector_store %arg4[%c0_16, %c0_17], %20 {strides = array<i32>} : memref<16x128xf32, #tpu.memory_space<vmem>>, vector<16x128xf32>,
    return
  }
  func.func @transform_0(%arg0: i32) -> (i32, i32, i32) {
    %c0_i32 = arith.constant 0 : i32
    %c0_i32_0 = arith.constant 0 : i32
    %c0_i32_1 = arith.constant 0 : i32
    return %c0_i32, %c0_i32_0, %arg0 : i32, i32, i32
  }
  func.func @transform_1(%arg0: i32) -> (i32, i32) {
    %c0_i32 = arith.constant 0 : i32
    %c0_i32_0 = arith.constant 0 : i32
    %c0_i32_1 = arith.constant 0 : i32
    return %c0_i32, %c0_i32_0 : i32, i32
  }
  func.func @transform_2(%arg0: i32) -> (i32, i32) {
    %c0_i32 = arith.constant 0 : i32
    %c0_i32_0 = arith.constant 0 : i32
    %c0_i32_1 = arith.constant 0 : i32
    return %c0_i32, %c0_i32_0 : i32, i32
  }
  func.func @transform_3(%arg0: i32) -> (i32, i32) {
    %c0_i32 = arith.constant 0 : i32
    %c0_i32_0 = arith.constant 0 : i32
    return %c0_i32, %arg0 : i32, i32
  }
}

</mosaic_0001>

<llo_original>
// kernel: c2_forward.1
$region0: #{c2_forward.1}
  #allocation0 [shape = 'u32[]', space=smem, size = 0x4, offset = 0x4, fixed_abs, tag = 'smem constant byte address 0x4 - core index']
  #allocation1 [shape = 'u32[72,128]{1,0:T(1,128)}', space=vmem, size = 0x9000, scoped, tag = 'internal scratch']
  %s0 = inlined_call_operand.vmem [shape: bf16[4,160,128], index: 0, kind: input, shape index: {}]
  %s1 = inlined_call_operand.vmem [shape: bf16[16,160], index: 1, kind: input, shape index: {}]
  %s2 = inlined_call_operand.vmem [shape: f32[16,1], index: 2, kind: input, shape index: {}]
  %s3 = inlined_call_operand.vmem [shape: f32[16,128], index: 3, kind: output, shape index: {}]
  %s4 = sld [smem:[#allocation0]]
  $region22: #{c2_forward.1} parent=0
    _
  %s6 = ssub.s32 1, %s4
  %s7 = scalar_select 0, %s6, %s4
  // Predicated region
  $region2: #{c2_forward.1} parent=0 // pred_check
    _
  $region3: #{c2_forward.1} parent=0 // pred_check_branch
    %9 = sbr.rel (0) target = $region5
  $region4: #{c2_forward.1} parent=0 // pred_region
    _
  $region5: #{c2_forward.1} parent=0 // pred_fallthru
    _
  // Predicated region
  $region6: #{c2_forward.1} parent=0 // pred_check
    _
  $region7: #{c2_forward.1} parent=0 // pred_check_branch
    %11 = sbr.rel (0) target = $region9
  $region8: #{c2_forward.1} parent=0 // pred_region
    _
  $region9: #{c2_forward.1} parent=0 // pred_fallthru
    _
  // Predicated region
  $region10: #{c2_forward.1} parent=0 // pred_check
    _
  $region11: #{c2_forward.1} parent=0 // pred_check_branch
    %13 = sbr.rel (0) target = $region13
  $region12: #{c2_forward.1} parent=0 // pred_region
    _
  $region13: #{c2_forward.1} parent=0 // pred_fallthru
    _
  %v15 = vld [vmem:[%s1] sm:$0xff]
  %v16 = vld [vmem:[%s1 + $0x8] sm:$0xff]
  %v17 = vld [vmem:[%s0] sm:$0xf]
  %v18 = vld [vmem:[%s0 + $0x4] sm:$0xf]
  %v19 = vld [vmem:[%s0 + $0x8] sm:$0xf]
  %v20 = vld [vmem:[%s0 + $0xc] sm:$0xf]
  %v21 = vld [vmem:[%s0 + $0x10] sm:$0xf]
  %v22 = vld [vmem:[%s0 + $0x14] sm:$0xf]
  %v23 = vld [vmem:[%s0 + $0x18] sm:$0xf]
  %v24 = vld [vmem:[%s0 + $0x1c] sm:$0xf]
  %v25 = vld [vmem:[%s0 + $0x20] sm:$0xf]
  %v26 = vld [vmem:[%s0 + $0x24] sm:$0xf]
  %v27 = vld [vmem:[%s0 + $0x28] sm:$0xf]
  %v28 = vld [vmem:[%s0 + $0x2c] sm:$0xf]
  %v29 = vld [vmem:[%s0 + $0x30] sm:$0xf]
  %v30 = vld [vmem:[%s0 + $0x34] sm:$0xf]
  %v31 = vld [vmem:[%s0 + $0x38] sm:$0xf]
  %v32 = vld [vmem:[%s0 + $0x3c] sm:$0xf]
  %v33 = vld [vmem:[%s0 + $0x40] sm:$0xf]
  %v34 = vld [vmem:[%s0 + $0x44] sm:$0xf]
  %v35 = vld [vmem:[%s0 + $0x48] sm:$0xf]
  %v36 = vld [vmem:[%s0 + $0x4c] sm:$0xf]
  %v39 = vunpack.c.l.b16 %v15
  %v40 = vunpack.c.h.b16 %v15
  %v41 = vunpack.c.l.b16 %v16
  %v42 = vunpack.c.h.b16 %v16
  %v43 = vpack.c.b16 %v41, %v39
  %v44 = vpack.c.b16 %v42, %v40
  %v66 = vunpack.c.l.b16 %v17
  %v67 = vunpack.c.l.b16 %v18
  %v68 = vunpack.c.l.b16 %v19
  %v69 = vunpack.c.l.b16 %v20
  %v70 = vunpack.c.l.b16 %v21
  %v71 = vunpack.c.l.b16 %v22
  %v72 = vunpack.c.l.b16 %v23
  %v73 = vunpack.c.l.b16 %v24
  %v74 = vunpack.c.l.b16 %v25
  %v75 = vunpack.c.l.b16 %v26
  %v76 = vunpack.c.l.b16 %v27
  %v77 = vunpack.c.l.b16 %v28
  %v78 = vunpack.c.l.b16 %v29
  %v79 = vunpack.c.l.b16 %v30
  %v80 = vunpack.c.l.b16 %v31
  %v81 = vunpack.c.l.b16 %v32
  %v82 = vunpack.c.l.b16 %v33
  %v83 = vunpack.c.l.b16 %v34
  %v84 = vunpack.c.l.b16 %v35
  %v85 = vunpack.c.l.b16 %v36
  %v86 = vpack.c.b16 %v67, %v66
  %v87 = vpack.c.b16 %v69, %v68
  %v88 = vpack.c.b16 %v71, %v70
  %v89 = vpack.c.b16 %v73, %v72
  %v90 = vpack.c.b16 %v75, %v74
  %v91 = vpack.c.b16 %v77, %v76
  %v92 = vpack.c.b16 %v79, %v78
  %v93 = vpack.c.b16 %v81, %v80
  %v94 = vpack.c.b16 %v83, %v82
  %v95 = vpack.c.b16 %v85, %v84
  %vm106 = vcmask 261120
  %v108 = vsel %vm106, %v44, 0
  %110 = vmatpush.bf16.msra.mxu0 %v93
  %111 = vmatpush.bf16.msra.mxu0 %v92
  %112 = vmatpush.bf16.msra.mxu0 %v91
  %113 = vmatpush.bf16.msra.mxu0 %v90
  %114 = vmatpush.bf16.msra.mxu0 %v89
  %115 = vmatpush.bf16.msra.mxu0 %v88
  %116 = vmatpush.bf16.msra.mxu0 %v87
  %117 = vmatpush.bf16.msra.mxu0 %v86
  %118 = vmatmul.bf16.gmra.mxu0 %v43
  %v119 = vpop.f32.mrf.mxu0
  %v120 = vadd.f32 0.0, %v119
  %v121 = vpop.f32.mrf.mxu0
  %v122 = vadd.f32 0.0, %v121
  %123 = vdwg.mxu0
  %124 = vmatpush.bf16.msra.mxu0 0
  %125 = vmatpush.bf16.msra.mxu0 0
  %126 = vmatpush.bf16.msra.mxu0 0
  %127 = vmatpush.bf16.msra.mxu0 0
  %128 = vmatpush.bf16.msra.mxu0 0
  %129 = vmatpush.bf16.msra.mxu0 0
  %130 = vmatpush.bf16.msra.mxu0 %v95
  %131 = vmatpush.bf16.msra.mxu0 %v94
  %132 = vmatmul.bf16.gmra.mxu0 %v108
  %v133 = vpop.f32.mrf.mxu0
  %v134 = vadd.f32 %v120, %v133
  %v135 = vpop.f32.mrf.mxu0
  %v136 = vadd.f32 %v122, %v135
  %137 = vdwg.mxu0
  %s138 = scalar_lea.vmem %s0, 80
  %v139 = vld [vmem:[%s138] sm:$0xf]
  %v140 = vld [vmem:[%s138 + $0x4] sm:$0xf]
  %v141 = vld [vmem:[%s138 + $0x8] sm:$0xf]
  %v142 = vld [vmem:[%s138 + $0xc] sm:$0xf]
  %v143 = vld [vmem:[%s138 + $0x10] sm:$0xf]
  %v144 = vld [vmem:[%s138 + $0x14] sm:$0xf]
  %v145 = vld [vmem:[%s138 + $0x18] sm:$0xf]
  %v146 = vld [vmem:[%s138 + $0x1c] sm:$0xf]
  %v147 = vld [vmem:[%s138 + $0x20] sm:$0xf]
  %v148 = vld [vmem:[%s138 + $0x24] sm:$0xf]
  %v149 = vld [vmem:[%s138 + $0x28] sm:$0xf]
  %v150 = vld [vmem:[%s138 + $0x2c] sm:$0xf]
  %v151 = vld [vmem:[%s138 + $0x30] sm:$0xf]
  %v152 = vld [vmem:[%s138 + $0x34] sm:$0xf]
  %v153 = vld [vmem:[%s138 + $0x38] sm:$0xf]
  %v154 = vld [vmem:[%s138 + $0x3c] sm:$0xf]
  %v155 = vld [vmem:[%s138 + $0x40] sm:$0xf]
  %v156 = vld [vmem:[%s138 + $0x44] sm:$0xf]
  %v157 = vld [vmem:[%s138 + $0x48] sm:$0xf]
  %v158 = vld [vmem:[%s138 + $0x4c] sm:$0xf]
  %v179 = vunpack.c.l.b16 %v139
  %v180 = vunpack.c.l.b16 %v140
  %v181 = vunpack.c.l.b16 %v141
  %v182 = vunpack.c.l.b16 %v142
  %v183 = vunpack.c.l.b16 %v143
  %v184 = vunpack.c.l.b16 %v144
  %v185 = vunpack.c.l.b16 %v145
  %v186 = vunpack.c.l.b16 %v146
  %v187 = vunpack.c.l.b16 %v147
  %v188 = vunpack.c.l.b16 %v148
  %v189 = vunpack.c.l.b16 %v149
  %v190 = vunpack.c.l.b16 %v150
  %v191 = vunpack.c.l.b16 %v151
  %v192 = vunpack.c.l.b16 %v152
  %v193 = vunpack.c.l.b16 %v153
  %v194 = vunpack.c.l.b16 %v154
  %v195 = vunpack.c.l.b16 %v155
  %v196 = vunpack.c.l.b16 %v156
  %v197 = vunpack.c.l.b16 %v157
  %v198 = vunpack.c.l.b16 %v158
  %v199 = vpack.c.b16 %v180, %v179
  %v200 = vpack.c.b16 %v182, %v181
  %v201 = vpack.c.b16 %v184, %v183
  %v202 = vpack.c.b16 %v186, %v185
  %v203 = vpack.c.b16 %v188, %v187
  %v204 = vpack.c.b16 %v190, %v189
  %v205 = vpack.c.b16 %v192, %v191
  %v206 = vpack.c.b16 %v194, %v193
  %v207 = vpack.c.b16 %v196, %v195
  %v208 = vpack.c.b16 %v198, %v197
  %219 = vmatpush.bf16.msra.mxu0 %v206
  %220 = vmatpush.bf16.msra.mxu0 %v205
  %221 = vmatpush.bf16.msra.mxu0 %v204
  %222 = vmatpush.bf16.msra.mxu0 %v203
  %223 = vmatpush.bf16.msra.mxu0 %v202
  %224 = vmatpush.bf16.msra.mxu0 %v201
  %225 = vmatpush.bf16.msra.mxu0 %v200
  %226 = vmatpush.bf16.msra.mxu0 %v199
  %227 = vmatmul.bf16.gmra.mxu0 %v43
  %v228 = vpop.f32.mrf.mxu0
  %v229 = vadd.f32 0.0, %v228
  %v230 = vpop.f32.mrf.mxu0
  %v231 = vadd.f32 0.0, %v230
  %232 = vdwg.mxu0
  %233 = vmatpush.bf16.msra.mxu0 0
  %234 = vmatpush.bf16.msra.mxu0 0
  %235 = vmatpush.bf16.msra.mxu0 0
  %236 = vmatpush.bf16.msra.mxu0 0
  %237 = vmatpush.bf16.msra.mxu0 0
  %238 = vmatpush.bf16.msra.mxu0 0
  %239 = vmatpush.bf16.msra.mxu0 %v208
  %240 = vmatpush.bf16.msra.mxu0 %v207
  %241 = vmatmul.bf16.gmra.mxu0 %v108
  %v242 = vpop.f32.mrf.mxu0
  %v243 = vadd.f32 %v229, %v242
  %v244 = vpop.f32.mrf.mxu0
  %v245 = vadd.f32 %v231, %v244
  %246 = vdwg.mxu0
  %s247 = scalar_lea.vmem %s0, 160
  %v248 = vld [vmem:[%s247] sm:$0xf]
  %v249 = vld [vmem:[%s247 + $0x4] sm:$0xf]
  %v250 = vld [vmem:[%s247 + $0x8] sm:$0xf]
  %v251 = vld [vmem:[%s247 + $0xc] sm:$0xf]
  %v252 = vld [vmem:[%s247 + $0x10] sm:$0xf]
  %v253 = vld [vmem:[%s247 + $0x14] sm:$0xf]
  %v254 = vld [vmem:[%s247 + $0x18] sm:$0xf]
  %v255 = vld [vmem:[%s247 + $0x1c] sm:$0xf]
  %v256 = vld [vmem:[%s247 + $0x20] sm:$0xf]
  %v257 = vld [vmem:[%s247 + $0x24] sm:$0xf]
  %v258 = vld [vmem:[%s247 + $0x28] sm:$0xf]
  %v259 = vld [vmem:[%s247 + $0x2c] sm:$0xf]
  %v260 = vld [vmem:[%s247 + $0x30] sm:$0xf]
  %v261 = vld [vmem:[%s247 + $0x34] sm:$0xf]
  %v262 = vld [vmem:[%s247 + $0x38] sm:$0xf]
  %v263 = vld [vmem:[%s247 + $0x3c] sm:$0xf]
  %v264 = vld [vmem:[%s247 + $0x40] sm:$0xf]
  %v265 = vld [vmem:[%s247 + $0x44] sm:$0xf]
  %v266 = vld [vmem:[%s247 + $0x48] sm:$0xf]
  %v267 = vld [vmem:[%s247 + $0x4c] sm:$0xf]
  %v288 = vunpack.c.l.b16 %v248
  %v289 = vunpack.c.l.b16 %v249
  %v290 = vunpack.c.l.b16 %v250
  %v291 = vunpack.c.l.b16 %v251
  %v292 = vunpack.c.l.b16 %v252
  %v293 = vunpack.c.l.b16 %v253
  %v294 = vunpack.c.l.b16 %v254
  %v295 = vunpack.c.l.b16 %v255
  %v296 = vunpack.c.l.b16 %v256
  %v297 = vunpack.c.l.b16 %v257
  %v298 = vunpack.c.l.b16 %v258
  %v299 = vunpack.c.l.b16 %v259
  %v300 = vunpack.c.l.b16 %v260
  %v301 = vunpack.c.l.b16 %v261
  %v302 = vunpack.c.l.b16 %v262
  %v303 = vunpack.c.l.b16 %v263
  %v304 = vunpack.c.l.b16 %v264
  %v305 = vunpack.c.l.b16 %v265
  %v306 = vunpack.c.l.b16 %v266
  %v307 = vunpack.c.l.b16 %v267
  %v308 = vpack.c.b16 %v289, %v288
  %v309 = vpack.c.b16 %v291, %v290
  %v310 = vpack.c.b16 %v293, %v292
  %v311 = vpack.c.b16 %v295, %v294
  %v312 = vpack.c.b16 %v297, %v296
  %v313 = vpack.c.b16 %v299, %v298
  %v314 = vpack.c.b16 %v301, %v300
  %v315 = vpack.c.b16 %v303, %v302
  %v316 = vpack.c.b16 %v305, %v304
  %v317 = vpack.c.b16 %v307, %v306
  %328 = vmatpush.bf16.msra.mxu0 %v315
  %329 = vmatpush.bf16.msra.mxu0 %v314
  %330 = vmatpush.bf16.msra.mxu0 %v313
  %331 = vmatpush.bf16.msra.mxu0 %v312
  %332 = vmatpush.bf16.msra.mxu0 %v311
  %333 = vmatpush.bf16.msra.mxu0 %v310
  %334 = vmatpush.bf16.msra.mxu0 %v309
  %335 = vmatpush.bf16.msra.mxu0 %v308
  %336 = vmatmul.bf16.gmra.mxu0 %v43
  %v337 = vpop.f32.mrf.mxu0
  %v338 = vadd.f32 0.0, %v337
  %v339 = vpop.f32.mrf.mxu0
  %v340 = vadd.f32 0.0, %v339
  %341 = vdwg.mxu0
  %342 = vmatpush.bf16.msra.mxu0 0
  %343 = vmatpush.bf16.msra.mxu0 0
  %344 = vmatpush.bf16.msra.mxu0 0
  %345 = vmatpush.bf16.msra.mxu0 0
  %346 = vmatpush.bf16.msra.mxu0 0
  %347 = vmatpush.bf16.msra.mxu0 0
  %348 = vmatpush.bf16.msra.mxu0 %v317
  %349 = vmatpush.bf16.msra.mxu0 %v316
  %350 = vmatmul.bf16.gmra.mxu0 %v108
  %v351 = vpop.f32.mrf.mxu0
  %v352 = vadd.f32 %v338, %v351
  %v353 = vpop.f32.mrf.mxu0
  %v354 = vadd.f32 %v340, %v353
  %355 = vdwg.mxu0
  %s356 = scalar_lea.vmem %s0, 240
  %v357 = vld [vmem:[%s356] sm:$0xf]
  %v358 = vld [vmem:[%s356 + $0x4] sm:$0xf]
  %v359 = vld [vmem:[%s356 + $0x8] sm:$0xf]
  %v360 = vld [vmem:[%s356 + $0xc] sm:$0xf]
  %v361 = vld [vmem:[%s356 + $0x10] sm:$0xf]
  %v362 = vld [vmem:[%s356 + $0x14] sm:$0xf]
  %v363 = vld [vmem:[%s356 + $0x18] sm:$0xf]
  %v364 = vld [vmem:[%s356 + $0x1c] sm:$0xf]
  %v365 = vld [vmem:[%s356 + $0x20] sm:$0xf]
  %v366 = vld [vmem:[%s356 + $0x24] sm:$0xf]
  %v367 = vld [vmem:[%s356 + $0x28] sm:$0xf]
  %v368 = vld [vmem:[%s356 + $0x2c] sm:$0xf]
  %v369 = vld [vmem:[%s356 + $0x30] sm:$0xf]
  %v370 = vld [vmem:[%s356 + $0x34] sm:$0xf]
  %v371 = vld [vmem:[%s356 + $0x38] sm:$0xf]
  %v372 = vld [vmem:[%s356 + $0x3c] sm:$0xf]
  %v373 = vld [vmem:[%s356 + $0x40] sm:$0xf]
  %v374 = vld [vmem:[%s356 + $0x44] sm:$0xf]
  %v375 = vld [vmem:[%s356 + $0x48] sm:$0xf]
  %v376 = vld [vmem:[%s356 + $0x4c] sm:$0xf]
  %v397 = vunpack.c.l.b16 %v357
  %v398 = vunpack.c.l.b16 %v358
  %v399 = vunpack.c.l.b16 %v359
  %v400 = vunpack.c.l.b16 %v360
  %v401 = vunpack.c.l.b16 %v361
  %v402 = vunpack.c.l.b16 %v362
  %v403 = vunpack.c.l.b16 %v363
  %v404 = vunpack.c.l.b16 %v364
  %v405 = vunpack.c.l.b16 %v365
  %v406 = vunpack.c.l.b16 %v366
  %v407 = vunpack.c.l.b16 %v367
  %v408 = vunpack.c.l.b16 %v368
  %v409 = vunpack.c.l.b16 %v369
  %v410 = vunpack.c.l.b16 %v370
  %v411 = vunpack.c.l.b16 %v371
  %v412 = vunpack.c.l.b16 %v372
  %v413 = vunpack.c.l.b16 %v373
  %v414 = vunpack.c.l.b16 %v374
  %v415 = vunpack.c.l.b16 %v375
  %v416 = vunpack.c.l.b16 %v376
  %v417 = vpack.c.b16 %v398, %v397
  %v418 = vpack.c.b16 %v400, %v399
  %v419 = vpack.c.b16 %v402, %v401
  %v420 = vpack.c.b16 %v404, %v403
  %v421 = vpack.c.b16 %v406, %v405
  %v422 = vpack.c.b16 %v408, %v407
  %v423 = vpack.c.b16 %v410, %v409
  %v424 = vpack.c.b16 %v412, %v411
  %v425 = vpack.c.b16 %v414, %v413
  %v426 = vpack.c.b16 %v416, %v415
  %437 = vmatpush.bf16.msra.mxu0 %v424
  %438 = vmatpush.bf16.msra.mxu0 %v423
  %439 = vmatpush.bf16.msra.mxu0 %v422
  %440 = vmatpush.bf16.msra.mxu0 %v421
  %441 = vmatpush.bf16.msra.mxu0 %v420
  %442 = vmatpush.bf16.msra.mxu0 %v419
  %443 = vmatpush.bf16.msra.mxu0 %v418
  %444 = vmatpush.bf16.msra.mxu0 %v417
  %445 = vmatmul.bf16.gmra.mxu0 %v43
  %v446 = vpop.f32.mrf.mxu0
  %v447 = vadd.f32 0.0, %v446
  %v448 = vpop.f32.mrf.mxu0
  %v449 = vadd.f32 0.0, %v448
  %450 = vdwg.mxu0
  %451 = vmatpush.bf16.msra.mxu0 0
  %452 = vmatpush.bf16.msra.mxu0 0
  %453 = vmatpush.bf16.msra.mxu0 0
  %454 = vmatpush.bf16.msra.mxu0 0
  %455 = vmatpush.bf16.msra.mxu0 0
  %456 = vmatpush.bf16.msra.mxu0 0
  %457 = vmatpush.bf16.msra.mxu0 %v426
  %458 = vmatpush.bf16.msra.mxu0 %v425
  %459 = vmatmul.bf16.gmra.mxu0 %v108
  %v460 = vpop.f32.mrf.mxu0
  %v461 = vadd.f32 %v447, %v460
  %v462 = vpop.f32.mrf.mxu0
  %v463 = vadd.f32 %v449, %v462
  %464 = vdwg.mxu0
  %v465 = vmax.f32 %v134, %v243
  %v466 = vmax.f32 %v136, %v245
  %v467 = vmax.f32 %v352, %v461
  %v468 = vmax.f32 %v354, %v463
  %v469 = vmax.f32 %v465, %v467
  %v470 = vmax.f32 %v466, %v468
  %v471 = vld [vmem:[%s2] sm:$0xff]
  %v472 = vld [vmem:[%s2 + $0x8] sm:$0xff]
  %474 = vset.pattern.permute.xlu0 0
  %475 = vperm.xlu0 %474, %v471
  %v476 = vpop.permute.xlu0 %475
  %479 = vset.pattern.permute.xlu0 0
  %480 = vperm.xlu0 %479, %v472
  %v481 = vpop.permute.xlu0 %480
  %v483 = vadd.f32 %v469, %v476
  %v484 = vadd.f32 %v470, %v481
  %v485 = vmax.f32 %v483, 0.0
  %v486 = vmax.f32 %v484, 0.0
  %487 = vst [vmem:[%s3] sm:$0xff] %v485
  %488 = vst [vmem:[%s3 + $0x8] sm:$0xff] %v486
  // Predicated region
  $region14: #{c2_forward.1} parent=0 // pred_check
    _
  $region15: #{c2_forward.1} parent=0 // pred_check_branch
    %490 = sbr.rel (0) target = $region17
  $region16: #{c2_forward.1} parent=0 // pred_region
    _
  $region17: #{c2_forward.1} parent=0 // pred_fallthru
    _
  // Predicated region
  $region18: #{c2_forward.1} parent=0 // pred_check
    _
  $region19: #{c2_forward.1} parent=0 // pred_check_branch
    %492 = sbr.rel (0) target = $region21
  $region20: #{c2_forward.1} parent=0 // pred_region
    _
  $region21: #{c2_forward.1} parent=0 // pred_fallthru
    _

</llo_original>
